<compile_context>
chip_gen: v6e
topology: v6e:2x2x1
jax: 0.10.0
libtpu: 0.0.40
codegen_flags: <defaults>
</compile_context>

<pallas_src>
import functools

import jax
import jax.numpy as jnp
from jax import lax
from jax.experimental import pallas as pl
from jax.experimental.pallas import tpu as pltpu

LANE = 128
SUBLANE = 8
_EPS = 1e-8
_VMEM_LIMIT = 32 * 1024 * 1024  # fits v5e/v6e (128 MiB phys) and v7x (64 MiB phys)


def _max_block_rows():
    """Generation-aware block height for the (rows, 128) slab."""
    try:
        kind = jax.devices()[0].device_kind.lower()
    except Exception:
        kind = ""
    # v5e: lower HBM BW -> 2 MiB blocks already amortize step overhead.
    if "v5 lite" in kind or "v5e" in kind or "v5lite" in kind:
        return 4096
    # v6e / v7x: 4 MiB f32 blocks (~5-8% step overhead).
    return 8192


def _pow_gamma(x, gamma):
    """x ** gamma, specialized for small integer / half-integer gamma."""
    g = float(gamma)
    gi = int(g)
    if g == gi and 0 <= gi <= 8:
        # Integer gamma: repeated VPU multiplies instead of pow
        # (pow = exp(g*log(x)) = 3 EUP transcendentals/elem).
        if gi == 0:
            return jnp.ones_like(x)
        r = x
        for _ in range(gi - 1):
            r = r * x
        return r
    g2 = 2.0 * g
    if g2 == int(g2) and 0.0 < g2 <= 17.0:
        # Half-integer gamma: one EUP sqrt + VPU multiplies.
        r = jnp.sqrt(x)
        for _ in range(gi):
            r = r * x
        return r
    # General gamma: pow (2 extra EUP ops/elem; can become the binding slot on v7x).
    return x ** jnp.float32(g)


def _focal_loss_tile(p, y, alpha0, alpha1, gamma):
    """Elementwise binary focal loss on one float32 VMEM tile."""
    # pc = y*p + (1-y)*(1-p)  ==  (1-p) + y*(2p-1)
    pc = (1.0 - p) + y * (2.0 * p - 1.0)
    # alpha_t = a0*y + a1*(1-y) == a1 + (a0-a1)*y
    alpha_t = alpha1 + (alpha0 - alpha1) * y
    pc = jnp.clip(pc, _EPS, 1.0 - _EPS)
    return -alpha_t * _pow_gamma(1.0 - pc, gamma) * jnp.log(pc)


def _focal_sum_kernel(p_ref, y_ref, out_ref, *, alpha0, alpha1, gamma,
                      block_rows, acc_rows, n_inner, last_block,
                      tail_valid, has_overflow):
    """Accumulates per-lane partial sums into the resident (acc_rows, 128) output."""
    p_idx = pl.program_id(0)   # "parallel": splits across TensorCores on v7x
    k_idx = pl.program_id(1)   # "arbitrary": reduction axis
    b = p_idx * n_inner + k_idx

    @pl.when(k_idx == 0)
    def _():
        out_ref[...] = jnp.zeros_like(out_ref)

    p = p_ref[...].astype(jnp.float32)
    y = y_ref[...].astype(jnp.float32)
    loss = _focal_loss_tile(p, y, alpha0, alpha1, gamma)

    def _accum(vals):
        # Fold (block_rows, 128) into acc_rows//8 independent (8,128) partials:
        # shorter dependent vector-add chains keep all VALU slots busy.
        out_ref[...] += vals.reshape(block_rows // acc_rows, acc_rows, LANE).sum(axis=0)

    if tail_valid is None:
        if has_overflow:
            @pl.when(b <= last_block)
            def _():
                _accum(loss)
        else:
            _accum(loss)
    else:
        @pl.when(b < last_block)
        def _():
            _accum(loss)

        @pl.when(b == last_block)
        def _():
            row = lax.broadcasted_iota(jnp.int32, (block_rows, LANE), 0)
            lane = lax.broadcasted_iota(jnp.int32, (block_rows, LANE), 1)
            flat = row * LANE + lane
            _accum(jnp.where(flat < tail_valid, loss, 0.0))
        # b > last_block (odd-block overflow step, DMA clamped to last block): skipped.


def _focal_elem_kernel(p_ref, y_ref, o_ref, *, alpha0, alpha1, gamma):
    """Elementwise focal loss, no reduction (edge-block stores masked by Pallas)."""
    p = p_ref[...].astype(jnp.float32)
    y = y_ref[...].astype(jnp.float32)
    o_ref[...] = _focal_loss_tile(p, y, alpha0, alpha1, gamma).astype(o_ref.dtype)


def binary_focal_loss(predicted_probs, collect_labels, alpha, gamma,
                      reduction="mean"):
    """Pallas implementation of BinaryFocalLoss.forward."""
    orig_shape = predicted_probs.shape
    n = 1
    for d in orig_shape:
        n *= int(d)

    # Lane-dense slab: pad only to a multiple of (8,128)=1024 elements.
    rows_padded = pl.cdiv(pl.cdiv(n, LANE), SUBLANE) * SUBLANE
    padded_n = rows_padded * LANE

    block_rows = min(_max_block_rows(), rows_padded)
    num_blocks = pl.cdiv(rows_padded, block_rows)   # last block may be ragged

    def to_slab(x):
        flat = x.reshape(-1)
        if padded_n != n:
            flat = jnp.pad(flat, (0, padded_n - n))
        return flat.reshape(rows_padded, LANE)

    p2 = to_slab(predicted_probs)
    y2 = to_slab(collect_labels)

    a0 = float(alpha[0])
    a1 = float(alpha[1])
    g = float(gamma)

    if reduction in ("mean", "sum"):
        # Always 2-way outer "parallel" split when there is >1 block so v7x can
        # use both TensorCores even with an odd block count.
        n_outer = 2 if num_blocks >= 2 else 1
        n_inner = pl.cdiv(num_blocks, n_outer)
        has_overflow = (n_outer * n_inner) != num_blocks

        block_elems = block_rows * LANE
        last_block = num_blocks - 1
        tail_valid = n - last_block * block_elems
        if tail_valid == block_elems:
            tail_valid = None   # fully valid last block -> no in-kernel mask

        acc_rows = 4 * SUBLANE if block_rows % (4 * SUBLANE) == 0 else SUBLANE

        in_spec = pl.BlockSpec(
            (block_rows, LANE),
            lambda pp, kk: (jnp.minimum(pp * n_inner + kk, last_block), 0))

        partials = pl.pallas_call(
            functools.partial(
                _focal_sum_kernel, alpha0=a0, alpha1=a1, gamma=g,
                block_rows=block_rows, acc_rows=acc_rows, n_inner=n_inner,
                last_block=last_block, tail_valid=tail_valid,
                has_overflow=has_overflow),
            out_shape=jax.ShapeDtypeStruct((n_outer * acc_rows, LANE), jnp.float32),
            grid_spec=pltpu.PrefetchScalarGridSpec(
                num_scalar_prefetch=0,
                grid=(n_outer, n_inner),
                in_specs=[in_spec, in_spec],
                out_specs=pl.BlockSpec((acc_rows, LANE), lambda pp, kk: (pp, 0)),
            ),
            compiler_params=pltpu.CompilerParams(
                dimension_semantics=("parallel", "arbitrary"),
                vmem_limit_bytes=_VMEM_LIMIT),
        )(p2, y2)

        total = jnp.sum(partials)   # tiny (n_outer*acc_rows*128) final reduce
        if reduction == "mean":
            return total / jnp.float32(n)
        return total

    elif reduction == "none":
        out_dtype = (predicted_probs.dtype
                     if jnp.issubdtype(predicted_probs.dtype, jnp.floating)
                     else jnp.float32)
        tile_spec = pl.BlockSpec((block_rows, LANE), lambda i: (i, 0))
        loss2 = pl.pallas_call(
            functools.partial(_focal_elem_kernel, alpha0=a0, alpha1=a1, gamma=g),
            out_shape=jax.ShapeDtypeStruct((rows_padded, LANE), out_dtype),
            grid_spec=pltpu.PrefetchScalarGridSpec(
                num_scalar_prefetch=0,
                grid=(num_blocks,),
                in_specs=[tile_spec, tile_spec],
                out_specs=tile_spec,
            ),
            compiler_params=pltpu.CompilerParams(
                dimension_semantics=("parallel",),
                vmem_limit_bytes=_VMEM_LIMIT),
        )(p2, y2)
        flat = loss2.reshape(-1)
        if padded_n != n:
            flat = flat[:n]     # only when a small (8,128) pad exists
        return flat.reshape(orig_shape)

    else:
        raise ValueError(f"Invalid reduction: {reduction}")


def _reference(predicted_probs, collect_labels, alpha, gamma, reduction="mean"):
    """Pure-JAX reference mirroring the PyTorch forward."""
    p = predicted_probs.astype(jnp.float32)
    y = collect_labels.astype(jnp.float32)
    pc = y * p + (1.0 - y) * (1.0 - p)
    alpha_t = alpha[0] * y + alpha[1] * (1.0 - y)
    pc = jnp.clip(pc, _EPS, 1.0 - _EPS)
    loss = -alpha_t * (1.0 - pc) ** gamma * jnp.log(pc)
    if reduction == "mean":
        return loss.mean()
    if reduction == "sum":
        return loss.sum()
    return loss


if __name__ == "__main__":
    # Deterministic "module init" parameters (no checkpoint loading).
    alpha = [0.75, 0.25]
    gamma = 2.0

    key = jax.random.PRNGKey(0)
    k_p, k_y = jax.random.split(key)
    B, C, H, W = 2, 1, 16, 16
    predicted_probs = jax.random.uniform(k_p, (B, C, H, W), jnp.float32)
    collect_labels = (jax.random.uniform(k_y, (B, C, H, W)) > 0.5).astype(jnp.float32)

    # mean
    out = jax.block_until_ready(
        binary_focal_loss(predicted_probs, collect_labels, alpha, gamma, "mean"))
    ref = _reference(predicted_probs, collect_labels, alpha, gamma, "mean")
    assert jnp.allclose(out, ref, rtol=1e-5, atol=1e-6), (out, ref)

    # sum
    out_sum = jax.block_until_ready(
        binary_focal_loss(predicted_probs, collect_labels, alpha, gamma, "sum"))
    ref_sum = _reference(predicted_probs, collect_labels, alpha, gamma, "sum")
    assert jnp.allclose(out_sum, ref_sum, rtol=1e-5, atol=1e-5), (out_sum, ref_sum)

    # none
    out_none = jax.block_until_ready(
        binary_focal_loss(predicted_probs, collect_labels, alpha, gamma, "none"))
    ref_none = _reference(predicted_probs, collect_labels, alpha, gamma, "none")
    assert jnp.allclose(out_none, ref_none, rtol=1e-5, atol=1e-6)

    print("KERNEL_OK")
</pallas_src>

<mosaic_0001>
module attributes {stable_mosaic.version = 11 : i64} {
  func.func @_focal_sum_kernel(%arg0: i32, %arg1: i32, %arg2: memref<8x128xf32, #tpu.memory_space<vmem>>, %arg3: memref<8x128xf32, #tpu.memory_space<vmem>>, %arg4: memref<8x128xf32, #tpu.memory_space<vmem>>) attributes {dimension_semantics = [#tpu.dimension_semantics<parallel>, #tpu.dimension_semantics<arbitrary>], iteration_bounds = array<i64: 1, 1>, scalar_prefetch = 0 : i64, scratch_operands = 0 : i64, tpu.core_type = #tpu.core_type<tc>, window_params = [{transform_indices = @transform_0, window_bounds = array<i64: 8, 128>}, {transform_indices = @transform_1, window_bounds = array<i64: 8, 128>}, {transform_indices = @transform_2, window_bounds = array<i64: 8, 128>}]} {
    %c1_i32 = arith.constant 1 : i32
    %0 = arith.muli %arg0, %c1_i32 : i32
    %1 = arith.addi %0, %arg1 : i32
    %c0_i32 = arith.constant 0 : i32
    %2 = arith.cmpi eq, %arg1, %c0_i32 : i32
    %3 = arith.extui %2 : i1 to i32
    %c0_i32_0 = arith.constant 0 : i32
    %4 = arith.cmpi ne, %3, %c0_i32_0 : i32
    scf.if %4 {
      %cst_16 = arith.constant 0.000000e+00 : f32
      %37 = vector.broadcast %cst_16 : f32 to vector<8x128xf32>
      %c0_17 = arith.constant 0 : index
      %c0_18 = arith.constant 0 : index
      %38 = vector.load %arg4[%c0_17, %c0_18] : memref<8x128xf32, #tpu.memory_space<vmem>>, vector<8x128xf32>
      tpu.vector_store %arg4[%c0_17, %c0_18], %37 {strides = array<i32>} : memref<8x128xf32, #tpu.memory_space<vmem>>, vector<8x128xf32>,
    } else {
    }
    %c0 = arith.constant 0 : index
    %c0_1 = arith.constant 0 : index
    %5 = vector.load %arg2[%c0, %c0_1] : memref<8x128xf32, #tpu.memory_space<vmem>>, vector<8x128xf32>
    %c0_2 = arith.constant 0 : index
    %c0_3 = arith.constant 0 : index
    %6 = vector.load %arg3[%c0_2, %c0_3] : memref<8x128xf32, #tpu.memory_space<vmem>>, vector<8x128xf32>
    %cst = arith.constant 1.000000e+00 : f32
    %7 = vector.broadcast %cst : f32 to vector<8x128xf32>
    %8 = arith.subf %7, %5 : vector<8x128xf32>
    %cst_4 = arith.constant 2.000000e+00 : f32
    %9 = vector.broadcast %cst_4 : f32 to vector<8x128xf32>
    %10 = arith.mulf %9, %5 : vector<8x128xf32>
    %cst_5 = arith.constant 1.000000e+00 : f32
    %11 = vector.broadcast %cst_5 : f32 to vector<8x128xf32>
    %12 = arith.subf %10, %11 : vector<8x128xf32>
    %13 = arith.mulf %6, %12 : vector<8x128xf32>
    %14 = arith.addf %8, %13 : vector<8x128xf32>
    %cst_6 = arith.constant 5.000000e-01 : f32
    %15 = vector.broadcast %cst_6 : f32 to vector<8x128xf32>
    %16 = arith.mulf %15, %6 : vector<8x128xf32>
    %cst_7 = arith.constant 2.500000e-01 : f32
    %17 = vector.broadcast %cst_7 : f32 to vector<8x128xf32>
    %18 = arith.addf %17, %16 : vector<8x128xf32>
    %cst_8 = arith.constant 9.99999993E-9 : f32
    %cst_9 = arith.constant 1.000000e+00 : f32
    %19 = vector.broadcast %cst_8 : f32 to vector<8x128xf32>
    %20 = arith.maximumf %19, %14 : vector<8x128xf32>
    %21 = vector.broadcast %cst_9 : f32 to vector<8x128xf32>
    %22 = arith.minimumf %21, %20 : vector<8x128xf32>
    %cst_10 = arith.constant 0.000000e+00 : f32
    %23 = vector.broadcast %cst_10 : f32 to vector<8x128xf32>
    %24 = arith.subf %23, %18 : vector<8x128xf32>
    %cst_11 = arith.constant 1.000000e+00 : f32
    %25 = vector.broadcast %cst_11 : f32 to vector<8x128xf32>
    %26 = arith.subf %25, %22 : vector<8x128xf32>
    %27 = arith.mulf %26, %26 : vector<8x128xf32>
    %28 = arith.mulf %24, %27 : vector<8x128xf32>
    %29 = math.log %22 : vector<8x128xf32>
    %30 = arith.mulf %28, %29 : vector<8x128xf32>
    %c0_i32_12 = arith.constant 0 : i32
    %31 = arith.cmpi slt, %1, %c0_i32_12 : i32
    %32 = arith.extui %31 : i1 to i32
    %c0_i32_13 = arith.constant 0 : i32
    %33 = arith.cmpi ne, %32, %c0_i32_13 : i32
    scf.if %33 {
      %c0_16 = arith.constant 0 : index
      %c0_17 = arith.constant 0 : index
      %37 = vector.load %arg4[%c0_16, %c0_17] : memref<8x128xf32, #tpu.memory_space<vmem>>, vector<8x128xf32>
      %38 = vector.shape_cast %30 : vector<8x128xf32> to vector<1x8x128xf32>
      %cst_18 = arith.constant dense<0.000000e+00> : vector<8x128xf32>
      %39 = vector.multi_reduction <add>, %38, %cst_18 [0] : vector<1x8x128xf32> to vector<8x128xf32>
      %40 = arith.addf %37, %39 : vector<8x128xf32>
      %c0_19 = arith.constant 0 : index
      %c0_20 = arith.constant 0 : index
      %41 = vector.load %arg4[%c0_19, %c0_20] : memref<8x128xf32, #tpu.memory_space<vmem>>, vector<8x128xf32>
      tpu.vector_store %arg4[%c0_19, %c0_20], %40 {strides = array<i32>} : memref<8x128xf32, #tpu.memory_space<vmem>>, vector<8x128xf32>,
    } else {
    }
    %c0_i32_14 = arith.constant 0 : i32
    %34 = arith.cmpi eq, %1, %c0_i32_14 : i32
    %35 = arith.extui %34 : i1 to i32
    %c0_i32_15 = arith.constant 0 : i32
    %36 = arith.cmpi ne, %35, %c0_i32_15 : i32
    scf.if %36 {
      %37 = tpu.iota {dimensions = array<i32: 0>} : vector<8x128xi32>
      %38 = tpu.iota {dimensions = array<i32: 1>} : vector<8x128xi32>
      %c128_i32 = arith.constant 128 : i32
      %39 = vector.broadcast %c128_i32 : i32 to vector<8x128xi32>
      %40 = arith.muli %37, %39 : vector<8x128xi32>
      %41 = arith.addi %40, %38 : vector<8x128xi32>
      %c512_i32 = arith.constant 512 : i32
      %42 = vector.broadcast %c512_i32 : i32 to vector<8x128xi32>
      %43 = arith.cmpi slt, %41, %42 : vector<8x128xi32>
      %cst_16 = arith.constant 0.000000e+00 : f32
      %44 = vector.broadcast %cst_16 : f32 to vector<8x128xf32>
      %45 = arith.select %43, %30, %44 : vector<8x128xi1>, vector<8x128xf32>
      %c0_17 = arith.constant 0 : index
      %c0_18 = arith.constant 0 : index
      %46 = vector.load %arg4[%c0_17, %c0_18] : memref<8x128xf32, #tpu.memory_space<vmem>>, vector<8x128xf32>
      %47 = vector.shape_cast %45 : vector<8x128xf32> to vector<1x8x128xf32>
      %cst_19 = arith.constant dense<0.000000e+00> : vector<8x128xf32>
      %48 = vector.multi_reduction <add>, %47, %cst_19 [0] : vector<1x8x128xf32> to vector<8x128xf32>
      %49 = arith.addf %46, %48 : vector<8x128xf32>
      %c0_20 = arith.constant 0 : index
      %c0_21 = arith.constant 0 : index
      %50 = vector.load %arg4[%c0_20, %c0_21] : memref<8x128xf32, #tpu.memory_space<vmem>>, vector<8x128xf32>
      tpu.vector_store %arg4[%c0_20, %c0_21], %49 {strides = array<i32>} : memref<8x128xf32, #tpu.memory_space<vmem>>, vector<8x128xf32>,
    } else {
    }
    return
  }
  func.func @transform_0(%arg0: i32, %arg1: i32) -> (i32, i32) {
    %c1_i32 = arith.constant 1 : i32
    %0 = arith.muli %arg0, %c1_i32 : i32
    %1 = arith.addi %0, %arg1 : i32
    %c0_i32 = arith.constant 0 : i32
    %2 = arith.minsi %1, %c0_i32 : i32
    %c0_i32_0 = arith.constant 0 : i32
    %c0_i32_1 = arith.constant 0 : i32
    return %2, %c0_i32_0 : i32, i32
  }
  func.func @transform_1(%arg0: i32, %arg1: i32) -> (i32, i32) {
    %c1_i32 = arith.constant 1 : i32
    %0 = arith.muli %arg0, %c1_i32 : i32
    %1 = arith.addi %0, %arg1 : i32
    %c0_i32 = arith.constant 0 : i32
    %2 = arith.minsi %1, %c0_i32 : i32
    %c0_i32_0 = arith.constant 0 : i32
    %c0_i32_1 = arith.constant 0 : i32
    return %2, %c0_i32_0 : i32, i32
  }
  func.func @transform_2(%arg0: i32, %arg1: i32) -> (i32, i32) {
    %c0_i32 = arith.constant 0 : i32
    %c0_i32_0 = arith.constant 0 : i32
    return %arg0, %c0_i32 : i32, i32
  }
}

</mosaic_0001>

<llo_original>
// kernel: tpu_custom_call.1
$region0: #{tpu_custom_call.1}
  #allocation0 [shape = 'u32[]', space=smem, size = 0x4, offset = 0x4, fixed_abs, tag = 'smem constant byte address 0x4 - core index']
  #allocation1 [shape = 'u32[144,128]{1,0:T(1,128)}', space=vmem, size = 0x12000, scoped, tag = 'internal scratch']
  %s0 = inlined_call_operand.hbm [shape: f32[8,128], index: 0, kind: input, shape index: {}]
  %s1 = inlined_call_operand.hbm [shape: f32[8,128], index: 1, kind: input, shape index: {}]
  %s2 = inlined_call_operand.hbm [shape: f32[8,128], index: 2, kind: output, shape index: {}]
  %s3 = sld [smem:[#allocation0]]
  $region38: #{tpu_custom_call.1} parent=0
    _
  %s5 = ssub.s32 1, %s3
  %s6 = scalar_select 0, %s5, %s3
  $region1: #{tpu_custom_call.1} parent=0
    #allocation2 [shape = 'u8[4096]{0}', space=vmem, size = 0x1000, scoped, tag = 'input window, operand 0, single buffered']
    #allocation3 [shape = 's32[1]{0}', space=sflag, size = 0x4, scoped, tag = 'scoped memory for tpu_custom_call.1']
    #allocation4 [shape = 's32[1]{0}', space=sflag, size = 0x4, scoped, tag = 'scoped memory for tpu_custom_call.1']
    #allocation5 [shape = 'u8[4096]{0}', space=vmem, size = 0x1000, scoped, tag = 'input window, operand 1, single buffered']
    #allocation6 [shape = 's32[1]{0}', space=sflag, size = 0x4, scoped, tag = 'scoped memory for tpu_custom_call.1']
    #allocation7 [shape = 'u8[4096]{0}', space=vmem, size = 0x1000, scoped, tag = 'output window, operand 0, single buffered']
    %7 = vsyncpa [#allocation3], 0
    %8 = vsyncpa [#allocation6], 0
    %9 = vsyncpa [#allocation4], 0
    // Predicated region
    $region2: #{tpu_custom_call.1} parent=1 // pred_check
      _
    $region3: #{tpu_custom_call.1} parent=1 // pred_check_branch
      %11 = sbr.rel (0) target = $region5
    $region4: #{tpu_custom_call.1} parent=1 // pred_region
      %s12 = sadd.s32 0, 0
      %p13 = scmp.lt.s32.totalorder %s12, 0
      %s14 = scalar_select %p13, %s12, 0
      %s16 = ssub.s32 128, 128
      %17 = vsyncadd [#allocation3], %s16
      %s18 = smul.addr %s14, 128
      %s19 = scalar_lea.hbm %s0, %s18
      %s21 = sshll.u32 [#allocation2], 4
      %s22 = int_to_ptr.vmem [resolvable:$true] %s21
      %24 = dma.hbm_to_vmem [thread:$0]  %s19, 128, %s22, [#allocation3]
    $region5: #{tpu_custom_call.1} parent=1 // pred_fallthru
      _
    // Predicated region
    $region6: #{tpu_custom_call.1} parent=1 // pred_check
      _
    $region7: #{tpu_custom_call.1} parent=1 // pred_check_branch
      %26 = sbr.rel (0) target = $region9
    $region8: #{tpu_custom_call.1} parent=1 // pred_region
      %s27 = sadd.s32 0, 0
      %p28 = scmp.lt.s32.totalorder %s27, 0
      %s29 = scalar_select %p28, %s27, 0
      %s31 = ssub.s32 128, 128
      %32 = vsyncadd [#allocation6], %s31
      %s33 = smul.addr %s29, 128
      %s34 = scalar_lea.hbm %s1, %s33
      %s36 = sshll.u32 [#allocation5], 4
      %s37 = int_to_ptr.vmem [resolvable:$true] %s36
      %39 = dma.hbm_to_vmem [thread:$0]  %s34, 128, %s37, [#allocation6]
    $region9: #{tpu_custom_call.1} parent=1 // pred_fallthru
      _
    // Predicated region
    $region10: #{tpu_custom_call.1} parent=1 // pred_check
      _
    $region11: #{tpu_custom_call.1} parent=1 // pred_check_branch
      %41 = sbr.rel (0) target = $region13
    $region12: #{tpu_custom_call.1} parent=1 // pred_region
      %42 = dma.done [#allocation3], 128
    $region13: #{tpu_custom_call.1} parent=1 // pred_fallthru
      _
    // Predicated region
    $region14: #{tpu_custom_call.1} parent=1 // pred_check
      _
    $region15: #{tpu_custom_call.1} parent=1 // pred_check_branch
      %44 = sbr.rel (0) target = $region17
    $region16: #{tpu_custom_call.1} parent=1 // pred_region
      %45 = dma.done [#allocation6], 128
    $region17: #{tpu_custom_call.1} parent=1 // pred_fallthru
      _
    %s46 = sadd.s32 0, 0
    %p47 = scmp.lt.s32.totalorder %s46, 0
    %s48 = scalar_select %p47, %s46, 0
    %s49 = sadd.s32 0, 0
    %p50 = scmp.lt.s32.totalorder %s49, 0
    %s51 = scalar_select %p50, %s49, 0
    %s52 = sadd.s32 0, 0
    %p53 = scmp.eq.s32.totalorder 0, 0
    // Predicated region
    $region18: #{tpu_custom_call.1} parent=1 // pred_check
      %p54 = pneg %p53
    $region19: #{tpu_custom_call.1} parent=1 // pred_check_branch
      %56 = sbr.rel (%p54) target = $region21
    $region20: #{tpu_custom_call.1} parent=1 // pred_region
      %57 = vst [vmem:[#allocation7] sm:$0xff] 0.0
    $region21: #{tpu_custom_call.1} parent=1 // pred_fallthru
      _
    %v58 = vld [vmem:[#allocation2] sm:$0xff]
    %v59 = vld [vmem:[#allocation5] sm:$0xff]
    %v60 = vsub.f32 1.0, %v58
    %v61 = vmul.f32 %v58, 2.0
    %v62 = vsub.f32 %v61, 1.0
    %v63 = vmul.f32 %v59, %v62
    %v64 = vadd.f32 %v60, %v63
    %v65 = vmul.f32 %v59, 0.5
    %v66 = vadd.f32 %v65, 0.25
    %v67 = vmax.f32 %v64, 1e-08
    %v68 = vmin.f32 %v67, 1.0
    %v69 = vsub.f32 0.0, %v66
    %v70 = vsub.f32 1.0, %v68
    %v71 = vmul.f32 %v70, %v70
    %v72 = vmul.f32 %v69, %v71
    %v73 = vlog2.pop %v68
    %v74 = vmul.f32 %v73, 0.6931472
    %v75 = vmul.f32 %v72, %v74
    %p76 = scmp.lt.s32.totalorder %s52, 0
    // Predicated region
    $region22: #{tpu_custom_call.1} parent=1 // pred_check
      %p77 = pneg %p76
    $region23: #{tpu_custom_call.1} parent=1 // pred_check_branch
      %79 = sbr.rel (%p77) target = $region25
    $region24: #{tpu_custom_call.1} parent=1 // pred_region
      %v80 = vld [vmem:[#allocation7] sm:$0xff]
      %v81 = vadd.f32 %v75, 0.0
      %v82 = vadd.f32 %v80, %v81
      %83 = vst [vmem:[#allocation7] sm:$0xff] %v82
    $region25: #{tpu_custom_call.1} parent=1 // pred_fallthru
      _
    %p84 = scmp.eq.s32.totalorder %s52, 0
    // Predicated region
    $region26: #{tpu_custom_call.1} parent=1 // pred_check
      %p85 = pneg %p84
    $region27: #{tpu_custom_call.1} parent=1 // pred_check_branch
      %87 = sbr.rel (%p85) target = $region29
    $region28: #{tpu_custom_call.1} parent=1 // pred_region
      %v88 = vlaneseq
      %v89 = vshrl.u32 %v88, 7
      %v90 = vlaneseq
      %v91 = vand.u32 %v90, 127
      %v92 = vmul.u32 %v89, 128
      %v93 = vadd.s32 %v92, %v91
      %vm94 = vcmp.lt.s32.totalorder %v93, 512
      %v95 = vsel %vm94, %v75, 0.0
      %v96 = vld [vmem:[#allocation7] sm:$0xff]
      %v97 = vadd.f32 %v95, 0.0
      %v98 = vadd.f32 %v96, %v97
      %99 = vst [vmem:[#allocation7] sm:$0xff] %v98
    $region29: #{tpu_custom_call.1} parent=1 // pred_fallthru
      _
    // Predicated region
    $region30: #{tpu_custom_call.1} parent=1 // pred_check
      _
    $region31: #{tpu_custom_call.1} parent=1 // pred_check_branch
      %101 = sbr.rel (0) target = $region33
    $region32: #{tpu_custom_call.1} parent=1 // pred_region
      %s103 = ssub.s32 128, 128
      %104 = vsyncadd [#allocation4], %s103
      %s106 = sshll.u32 [#allocation7], 4
      %s107 = int_to_ptr.vmem [resolvable:$true] %s106
      %109 = dma.vmem_to_hbm [thread:$0]  %s107, 128, %s2, [#allocation4]
    $region33: #{tpu_custom_call.1} parent=1 // pred_fallthru
      _
    // Predicated region
    $region34: #{tpu_custom_call.1} parent=1 // pred_check
      _
    $region35: #{tpu_custom_call.1} parent=1 // pred_check_branch
      %111 = sbr.rel (0) target = $region37
    $region36: #{tpu_custom_call.1} parent=1 // pred_region
      %112 = dma.done [#allocation4], 128
    $region37: #{tpu_custom_call.1} parent=1 // pred_fallthru
      _
    %113 = vsyncpa [#allocation3], 1
    %114 = vsyncpa [#allocation6], 1
    %115 = vsyncpa [#allocation4], 1

</llo_original>
